<compile_context>
chip_gen: v6e
topology: v6e:2x2x1
jax: 0.10.0
libtpu: 0.0.40
codegen_flags: <defaults>
</compile_context>

<pallas_src>
import functools

import jax
import jax.numpy as jnp
from jax.experimental import pallas as pl
from jax.experimental.pallas import tpu as pltpu


def _round_up(n, m):
    return ((n + m - 1) // m) * m


def _gdl_kernel(centers_ref, m_ref, xy_ref, w_ref, out_ref,
                acc_ref, bw_ref, bx_ref, by_ref, *, inv_two_tv, rem_p):
    k = pl.program_id(1)
    nk = pl.num_programs(1)

    @pl.when(k == 0)
    def _init():
        acc_ref[...] = jnp.zeros_like(acc_ref)
        bw_ref[...] = jnp.full(bw_ref.shape, -jnp.inf, dtype=bw_ref.dtype)
        bx_ref[...] = jnp.zeros_like(bx_ref)
        by_ref[...] = jnp.zeros_like(by_ref)

    w = w_ref[...]                                   # (tb, tp) weights tile
    tp = w.shape[-1]

    if rem_p:
        # Ragged P tail: lanes >= rem_p of the last tile hold stale VMEM data;
        # zero them so they contribute nothing (and can never be NaN/inf).
        lane = jax.lax.broadcasted_iota(jnp.int32, (1, tp), 1)
        valid = jnp.where(k == nk - 1, rem_p, tp)
        w = jnp.where(lane < valid, w, 0.0)

    # Weighted moments on the MXU: columns of m are [1, u, v, u^2, v^2, 0, 0, 0]
    # with u = x - cx, v = y - cy (centered coordinates).
    acc_ref[...] += jnp.dot(w, m_ref[...], preferred_element_type=jnp.float32)

    # Running argmax over the spot axis.  Coordinates at the max-weight lane
    # are pulled out with masked lane-maxes over the RAW coordinate rows
    # (no second matmul, no iota/first-occurrence machinery).
    tile_max = jnp.max(w, axis=-1, keepdims=True)                    # (tb, 1)
    is_max = w == tile_max                                           # (tb, tp)
    x_row = xy_ref[0:1, :]                                           # (1, tp)
    y_row = xy_ref[1:2, :]
    sel_x = jnp.max(jnp.where(is_max, x_row, -jnp.inf), axis=-1, keepdims=True)
    sel_y = jnp.max(jnp.where(is_max, y_row, -jnp.inf), axis=-1, keepdims=True)

    upd = tile_max > bw_ref[...]                                     # (tb, 1)
    bw_ref[...] = jnp.where(upd, tile_max, bw_ref[...])
    bx_ref[...] = jnp.where(upd, sel_x, bx_ref[...])
    by_ref[...] = jnp.where(upd, sel_y, by_ref[...])

    @pl.when(k == nk - 1)
    def _finalize():
        cx = centers_ref[0]
        cy = centers_ref[1]
        s = acc_ref[...]                                             # (tb, 8)
        s_w = s[:, 0:1]
        s_wu, s_wv = s[:, 1:2], s[:, 2:3]
        s_wuu, s_wvv = s[:, 3:4], s[:, 4:5]

        # Exact reconstruction in raw coordinates (holds for any weights, the
        # reference does NOT normalize by sum(w)):
        #   mean_x = S_wu + cx*S_w ;  mu_x = mean_x - cx
        #   var_x  = S_wuu - 2*mu_x*S_wu + mu_x^2*S_w
        mean_x = s_wu + cx * s_w
        mean_y = s_wv + cy * s_w
        mu_x = mean_x - cx
        mu_y = mean_y - cy
        var_x = s_wuu - 2.0 * mu_x * s_wu + mu_x * mu_x * s_w
        var_y = s_wvv - 2.0 * mu_y * s_wv + mu_y * mu_y * s_w

        tx = bx_ref[...]                       # raw coords at the argmax spot
        ty = by_ref[...]

        row_loss = ((mean_x - tx) ** 2 + (mean_y - ty) ** 2) * inv_two_tv \
                   + 0.5 * (var_x + var_y)                           # (tb, 1)
        # Lane-dense store (replicated across 128 lanes); wrapper reads col 0.
        out_ref[...] = jnp.broadcast_to(row_loss, out_ref.shape)


def gaussian_density_loss(distribution, weights, target_variance=0.1,
                          target_means=None, *, block_b=512, block_p=2048):
    """Pallas implementation of GaussianDensityLoss.forward.

    distribution: (P, 2) float32 spot coordinates.
    weights:      (B, P) float32 (required; the reference's weights=None branch
                  is ill-typed and unsupported).  The argmax path assumes each
                  real row has at least one weight > 0 (true for softmax).
    target_means: accepted for signature parity; unused by the reference.
    """
    # TODO(synk): the torch.sort / top-10 / torch.randint `indices_choice` block
    # in the reference forward is dead code (never affects the returned loss);
    # intentionally omitted.
    del target_means

    distribution = jnp.asarray(distribution, jnp.float32)
    weights = jnp.asarray(weights, jnp.float32)
    B, P = weights.shape

    tb = min(block_b, _round_up(B, 8))        # multiple of 8
    tp = min(block_p, _round_up(P, 128))      # multiple of 128
    nb = pl.cdiv(B, tb)
    nk = pl.cdiv(P, tp)
    P_pad = nk * tp                           # padding only for the tiny side inputs
    rem_p = P % tp                            # static; 0 -> no in-kernel masking

    x = distribution[:, 0]
    y = distribution[:, 1]
    cx = jnp.mean(x)
    cy = jnp.mean(y)
    centers = jnp.stack([cx, cy]).astype(jnp.float32)        # (2,) -> SMEM

    # Compact stats matrix, built once: columns [1, u, v, u^2, v^2, 0, 0, 0]
    # over CENTERED coordinates; padded spot rows are zero.
    u = x - cx
    v = y - cy
    cols = jnp.stack([jnp.ones_like(u), u, v, u * u, v * v,
                      jnp.zeros_like(u), jnp.zeros_like(u),
                      jnp.zeros_like(u)], axis=1)             # (P, 8)
    m = jnp.zeros((P_pad, 8), jnp.float32).at[:P, :].set(cols)

    # Raw coordinates along the lane axis (rows 0/1 = x/y) for argmax-coordinate
    # extraction; padded lanes are -inf so they can never win the masked max.
    xy = jnp.full((8, P_pad), -jnp.inf, jnp.float32)
    xy = xy.at[0, :P].set(x).at[1, :P].set(y)

    kernel = functools.partial(
        _gdl_kernel,
        inv_two_tv=float(1.0 / (2.0 * float(target_variance))),
        rem_p=rem_p)

    cost = pl.CostEstimate(
        flops=int(2 * B * P * 8),
        transcendentals=0,
        bytes_accessed=int(B * P * 4 + P_pad * 8 * 4 + 8 * P_pad * 4
                           + nb * tb * 128 * 4),
    )

    per_row = pl.pallas_call(
        kernel,
        out_shape=jax.ShapeDtypeStruct((nb * tb, 128), jnp.float32),
        grid_spec=pltpu.PrefetchScalarGridSpec(
            num_scalar_prefetch=0,
            grid=(nb, nk),
            in_specs=[
                pl.BlockSpec(memory_space=pltpu.MemorySpace.SMEM),   # centers (2,)
                pl.BlockSpec((tp, 8), lambda i, k: (k, 0)),          # stats matrix
                pl.BlockSpec((8, tp), lambda i, k: (0, k)),          # raw coord rows
                pl.BlockSpec((tb, tp), lambda i, k: (i, k)),         # weights (ragged)
            ],
            out_specs=pl.BlockSpec((tb, 128), lambda i, k: (i, 0)),
            scratch_shapes=[
                pltpu.VMEM((tb, 8), jnp.float32),    # moment accumulator
                pltpu.VMEM((tb, 1), jnp.float32),    # running max weight
                pltpu.VMEM((tb, 1), jnp.float32),    # x at running argmax
                pltpu.VMEM((tb, 1), jnp.float32),    # y at running argmax
            ],
        ),
        compiler_params=pltpu.CompilerParams(
            dimension_semantics=("parallel", "arbitrary"),
        ),
        cost_estimate=cost,
    )(centers, m, xy, weights)

    # Final mean over the true (unpadded) batch rows.
    return jnp.mean(per_row[:B, 0])


def gaussian_density_loss_ref(distribution, weights, target_variance=0.1):
    """Pure-JAX reference matching the PyTorch forward."""
    x = distribution[:, 0]
    y = distribution[:, 1]
    mean_x = jnp.sum(weights * x[None, :], axis=1)
    mean_y = jnp.sum(weights * y[None, :], axis=1)
    am = jnp.argmax(weights, axis=1)
    target_x = x[am]
    target_y = y[am]
    var_x = jnp.sum(weights * (x[None, :] - mean_x[:, None]) ** 2, axis=1)
    var_y = jnp.sum(weights * (y[None, :] - mean_y[:, None]) ** 2, axis=1)
    gll = jnp.mean(((mean_x - target_x) ** 2 + (mean_y - target_y) ** 2)
                   / (2.0 * target_variance))
    vl = jnp.mean((var_x + var_y) / 2.0)
    return gll + vl


if __name__ == "__main__":
    key = jax.random.PRNGKey(0)
    k_coords, k_w = jax.random.split(key)

    # Deliberately ragged small shapes: B=21 (-> 3 row tiles of 8), P=600
    # (-> 5 P tiles of 128 with an 88-lane ragged tail).
    B, P = 21, 600
    target_variance = 0.1

    distribution = jax.random.uniform(k_coords, (P, 2), dtype=jnp.float32)
    weights = jax.nn.softmax(jax.random.normal(k_w, (B, P), dtype=jnp.float32), axis=1)

    ref = gaussian_density_loss_ref(distribution, weights, target_variance)

    # Small tiles so both grid axes have multiple steps and the ragged-tail
    # masking path is exercised (grid = (3, 5)).
    out = gaussian_density_loss(distribution, weights, target_variance,
                                block_b=8, block_p=128)
    out = jax.block_until_ready(out)
    assert jnp.allclose(out, ref, rtol=5e-3, atol=5e-3), (out, ref)

    # Default (large-tile) configuration; clamps to 24 x 640 here (grid (1, 1)).
    out2 = gaussian_density_loss(distribution, weights, target_variance)
    out2 = jax.block_until_ready(out2)
    assert jnp.allclose(out2, ref, rtol=5e-3, atol=5e-3), (out2, ref)

    # Also exercise the jitted path (centers/stats become traced inputs).
    out3 = jax.jit(lambda d, w: gaussian_density_loss(d, w, 0.1))(distribution, weights)
    out3 = jax.block_until_ready(out3)
    assert jnp.allclose(out3, ref, rtol=5e-3, atol=5e-3), (out3, ref)

    print("KERNEL_OK")
</pallas_src>

<mosaic_0001>
module attributes {stable_mosaic.version = 11 : i64} {
  func.func @_gdl_kernel(%arg0: i32, %arg1: i32, %arg2: memref<2xf32, #tpu.memory_space<smem>>, %arg3: memref<128x8xf32, #tpu.memory_space<vmem>>, %arg4: memref<8x128xf32, #tpu.memory_space<vmem>>, %arg5: memref<8x128xf32, #tpu.memory_space<vmem>>, %arg6: memref<8x128xf32, #tpu.memory_space<vmem>>, %arg7: memref<8x8xf32, #tpu.memory_space<vmem>>, %arg8: memref<8x1xf32, #tpu.memory_space<vmem>>, %arg9: memref<8x1xf32, #tpu.memory_space<vmem>>, %arg10: memref<8x1xf32, #tpu.memory_space<vmem>>) attributes {dimension_semantics = [#tpu.dimension_semantics<parallel>, #tpu.dimension_semantics<arbitrary>], iteration_bounds = array<i64: 3, 5>, scalar_prefetch = 0 : i64, scratch_operands = 4 : i64, tpu.core_type = #tpu.core_type<tc>, window_params = [{transform_indices = @transform_0, window_bounds = array<i64: 2>}, {transform_indices = @transform_1, window_bounds = array<i64: 128, 8>}, {transform_indices = @transform_2, window_bounds = array<i64: 8, 128>}, {transform_indices = @transform_3, window_bounds = array<i64: 8, 128>}, {transform_indices = @transform_4, window_bounds = array<i64: 8, 128>}]} {
    %c0_i32 = arith.constant 0 : i32
    %0 = arith.cmpi eq, %arg1, %c0_i32 : i32
    %1 = arith.extui %0 : i1 to i32
    %c0_i32_0 = arith.constant 0 : i32
    %2 = arith.cmpi ne, %1, %c0_i32_0 : i32
    scf.if %2 {
      %cst_33 = arith.constant 0.000000e+00 : f32
      %50 = vector.broadcast %cst_33 : f32 to vector<8x8xf32>
      %c0_34 = arith.constant 0 : index
      %c0_35 = arith.constant 0 : index
      %51 = vector.load %arg7[%c0_34, %c0_35] : memref<8x8xf32, #tpu.memory_space<vmem>>, vector<8x8xf32>
      tpu.vector_store %arg7[%c0_34, %c0_35], %50 {strides = array<i32>} : memref<8x8xf32, #tpu.memory_space<vmem>>, vector<8x8xf32>,
      %cst_36 = arith.constant 0xFF800000 : f32
      %52 = vector.broadcast %cst_36 : f32 to vector<8x1xf32>
      %c0_37 = arith.constant 0 : index
      %c0_38 = arith.constant 0 : index
      %53 = vector.load %arg8[%c0_37, %c0_38] : memref<8x1xf32, #tpu.memory_space<vmem>>, vector<8x1xf32>
      tpu.vector_store %arg8[%c0_37, %c0_38], %52 {strides = array<i32>} : memref<8x1xf32, #tpu.memory_space<vmem>>, vector<8x1xf32>,
      %cst_39 = arith.constant 0.000000e+00 : f32
      %54 = vector.broadcast %cst_39 : f32 to vector<8x1xf32>
      %c0_40 = arith.constant 0 : index
      %c0_41 = arith.constant 0 : index
      %55 = vector.load %arg9[%c0_40, %c0_41] : memref<8x1xf32, #tpu.memory_space<vmem>>, vector<8x1xf32>
      tpu.vector_store %arg9[%c0_40, %c0_41], %54 {strides = array<i32>} : memref<8x1xf32, #tpu.memory_space<vmem>>, vector<8x1xf32>,
      %cst_42 = arith.constant 0.000000e+00 : f32
      %56 = vector.broadcast %cst_42 : f32 to vector<8x1xf32>
      %c0_43 = arith.constant 0 : index
      %c0_44 = arith.constant 0 : index
      %57 = vector.load %arg10[%c0_43, %c0_44] : memref<8x1xf32, #tpu.memory_space<vmem>>, vector<8x1xf32>
      tpu.vector_store %arg10[%c0_43, %c0_44], %56 {strides = array<i32>} : memref<8x1xf32, #tpu.memory_space<vmem>>, vector<8x1xf32>,
    } else {
    }
    %c0 = arith.constant 0 : index
    %c0_1 = arith.constant 0 : index
    %3 = vector.load %arg5[%c0, %c0_1] : memref<8x128xf32, #tpu.memory_space<vmem>>, vector<8x128xf32>
    %4 = tpu.iota {dimensions = array<i32: 1>} : vector<1x128xi32>
    %c4_i32 = arith.constant 4 : i32
    %5 = arith.cmpi eq, %arg1, %c4_i32 : i32
    %c88_i32 = arith.constant 88 : i32
    %c128_i32 = arith.constant 128 : i32
    %6 = arith.select %5, %c88_i32, %c128_i32 : i32
    %7 = vector.broadcast %6 : i32 to vector<1x128xi32>
    %8 = arith.cmpi slt, %4, %7 : vector<1x128xi32>
    %cst = arith.constant 0.000000e+00 : f32
    %9 = vector.shape_cast %8 : vector<1x128xi1> to vector<1x128xi1>
    %10 = vector.broadcast %9 : vector<1x128xi1> to vector<8x128xi1>
    %11 = vector.broadcast %cst : f32 to vector<8x128xf32>
    %12 = arith.select %10, %3, %11 : vector<8x128xi1>, vector<8x128xf32>
    %c0_2 = arith.constant 0 : index
    %c0_3 = arith.constant 0 : index
    %13 = vector.load %arg7[%c0_2, %c0_3] : memref<8x8xf32, #tpu.memory_space<vmem>>, vector<8x8xf32>
    %c0_4 = arith.constant 0 : index
    %c0_5 = arith.constant 0 : index
    %14 = vector.load %arg3[%c0_4, %c0_5] : memref<128x8xf32, #tpu.memory_space<vmem>>, vector<128x8xf32>
    %cst_6 = arith.constant dense<0.000000e+00> : vector<8x8xf32>
    %15 = tpu.matmul %12, %14, %cst_6 {dimension_numbers = #tpu.dot_dimension_numbers<[1], [0], [0], [1], [0, 0, 1, 1], [], []>} : vector<8x128xf32>, vector<128x8xf32>, vector<8x8xf32> -> vector<8x8xf32>
    %16 = arith.addf %13, %15 : vector<8x8xf32>
    %c0_7 = arith.constant 0 : index
    %c0_8 = arith.constant 0 : index
    %17 = vector.load %arg7[%c0_7, %c0_8] : memref<8x8xf32, #tpu.memory_space<vmem>>, vector<8x8xf32>
    tpu.vector_store %arg7[%c0_7, %c0_8], %16 {strides = array<i32>} : memref<8x8xf32, #tpu.memory_space<vmem>>, vector<8x8xf32>,
    %cst_9 = arith.constant dense<0xFF800000> : vector<8xf32>
    %18 = vector.multi_reduction <maximumf>, %12, %cst_9 [1] : vector<8x128xf32> to vector<8xf32>
    %19 = vector.shape_cast %18 : vector<8xf32> to vector<8x1xf32>
    %20 = vector.broadcast %19 : vector<8x1xf32> to vector<8x128xf32>
    %21 = arith.cmpf oeq, %12, %20 : vector<8x128xf32>
    %c0_10 = arith.constant 0 : index
    %c0_11 = arith.constant 0 : index
    %22 = vector.load %arg4[%c0_10, %c0_11] : memref<8x128xf32, #tpu.memory_space<vmem>>, vector<1x128xf32>
    %c1 = arith.constant 1 : index
    %c0_12 = arith.constant 0 : index
    %23 = vector.load %arg4[%c1, %c0_12] : memref<8x128xf32, #tpu.memory_space<vmem>>, vector<1x128xf32>
    %cst_13 = arith.constant 0xFF800000 : f32
    %24 = vector.shape_cast %22 : vector<1x128xf32> to vector<1x128xf32>
    %25 = vector.broadcast %24 : vector<1x128xf32> to vector<8x128xf32>
    %26 = vector.broadcast %cst_13 : f32 to vector<8x128xf32>
    %27 = arith.select %21, %25, %26 : vector<8x128xi1>, vector<8x128xf32>
    %cst_14 = arith.constant dense<0xFF800000> : vector<8xf32>
    %28 = vector.multi_reduction <maximumf>, %27, %cst_14 [1] : vector<8x128xf32> to vector<8xf32>
    %29 = vector.shape_cast %28 : vector<8xf32> to vector<8x1xf32>
    %cst_15 = arith.constant 0xFF800000 : f32
    %30 = vector.shape_cast %23 : vector<1x128xf32> to vector<1x128xf32>
    %31 = vector.broadcast %30 : vector<1x128xf32> to vector<8x128xf32>
    %32 = vector.broadcast %cst_15 : f32 to vector<8x128xf32>
    %33 = arith.select %21, %31, %32 : vector<8x128xi1>, vector<8x128xf32>
    %cst_16 = arith.constant dense<0xFF800000> : vector<8xf32>
    %34 = vector.multi_reduction <maximumf>, %33, %cst_16 [1] : vector<8x128xf32> to vector<8xf32>
    %35 = vector.shape_cast %34 : vector<8xf32> to vector<8x1xf32>
    %c0_17 = arith.constant 0 : index
    %c0_18 = arith.constant 0 : index
    %36 = vector.load %arg8[%c0_17, %c0_18] : memref<8x1xf32, #tpu.memory_space<vmem>>, vector<8x1xf32>
    %37 = arith.cmpf ogt, %19, %36 : vector<8x1xf32>
    %c0_19 = arith.constant 0 : index
    %c0_20 = arith.constant 0 : index
    %38 = vector.load %arg8[%c0_19, %c0_20] : memref<8x1xf32, #tpu.memory_space<vmem>>, vector<8x1xf32>
    %39 = arith.select %37, %19, %38 : vector<8x1xi1>, vector<8x1xf32>
    %c0_21 = arith.constant 0 : index
    %c0_22 = arith.constant 0 : index
    %40 = vector.load %arg8[%c0_21, %c0_22] : memref<8x1xf32, #tpu.memory_space<vmem>>, vector<8x1xf32>
    tpu.vector_store %arg8[%c0_21, %c0_22], %39 {strides = array<i32>} : memref<8x1xf32, #tpu.memory_space<vmem>>, vector<8x1xf32>,
    %c0_23 = arith.constant 0 : index
    %c0_24 = arith.constant 0 : index
    %41 = vector.load %arg9[%c0_23, %c0_24] : memref<8x1xf32, #tpu.memory_space<vmem>>, vector<8x1xf32>
    %42 = arith.select %37, %29, %41 : vector<8x1xi1>, vector<8x1xf32>
    %c0_25 = arith.constant 0 : index
    %c0_26 = arith.constant 0 : index
    %43 = vector.load %arg9[%c0_25, %c0_26] : memref<8x1xf32, #tpu.memory_space<vmem>>, vector<8x1xf32>
    tpu.vector_store %arg9[%c0_25, %c0_26], %42 {strides = array<i32>} : memref<8x1xf32, #tpu.memory_space<vmem>>, vector<8x1xf32>,
    %c0_27 = arith.constant 0 : index
    %c0_28 = arith.constant 0 : index
    %44 = vector.load %arg10[%c0_27, %c0_28] : memref<8x1xf32, #tpu.memory_space<vmem>>, vector<8x1xf32>
    %45 = arith.select %37, %35, %44 : vector<8x1xi1>, vector<8x1xf32>
    %c0_29 = arith.constant 0 : index
    %c0_30 = arith.constant 0 : index
    %46 = vector.load %arg10[%c0_29, %c0_30] : memref<8x1xf32, #tpu.memory_space<vmem>>, vector<8x1xf32>
    tpu.vector_store %arg10[%c0_29, %c0_30], %45 {strides = array<i32>} : memref<8x1xf32, #tpu.memory_space<vmem>>, vector<8x1xf32>,
    %c4_i32_31 = arith.constant 4 : i32
    %47 = arith.cmpi eq, %arg1, %c4_i32_31 : i32
    %48 = arith.extui %47 : i1 to i32
    %c0_i32_32 = arith.constant 0 : i32
    %49 = arith.cmpi ne, %48, %c0_i32_32 : i32
    scf.if %49 {
      %c0_33 = arith.constant 0 : index
      %50 = memref.load %arg2[%c0_33] : memref<2xf32, #tpu.memory_space<smem>>
      %c1_34 = arith.constant 1 : index
      %51 = memref.load %arg2[%c1_34] : memref<2xf32, #tpu.memory_space<smem>>
      %c0_35 = arith.constant 0 : index
      %c0_36 = arith.constant 0 : index
      %52 = vector.load %arg7[%c0_35, %c0_36] : memref<8x8xf32, #tpu.memory_space<vmem>>, vector<8x8xf32>
      %53 = vector.extract_strided_slice %52 {offsets = [0, 0], sizes = [8, 1], strides = [1, 1]} : vector<8x8xf32> to vector<8x1xf32>
      %54 = vector.extract_strided_slice %52 {offsets = [0, 1], sizes = [8, 1], strides = [1, 1]} : vector<8x8xf32> to vector<8x1xf32>
      %55 = vector.extract_strided_slice %52 {offsets = [0, 2], sizes = [8, 1], strides = [1, 1]} : vector<8x8xf32> to vector<8x1xf32>
      %56 = vector.extract_strided_slice %52 {offsets = [0, 3], sizes = [8, 1], strides = [1, 1]} : vector<8x8xf32> to vector<8x1xf32>
      %57 = vector.extract_strided_slice %52 {offsets = [0, 4], sizes = [8, 1], strides = [1, 1]} : vector<8x8xf32> to vector<8x1xf32>
      %58 = vector.broadcast %50 : f32 to vector<8x1xf32>
      %59 = arith.mulf %58, %53 : vector<8x1xf32>
      %60 = arith.addf %54, %59 : vector<8x1xf32>
      %61 = vector.broadcast %51 : f32 to vector<8x1xf32>
      %62 = arith.mulf %61, %53 : vector<8x1xf32>
      %63 = arith.addf %55, %62 : vector<8x1xf32>
      %64 = vector.broadcast %50 : f32 to vector<8x1xf32>
      %65 = arith.subf %60, %64 : vector<8x1xf32>
      %66 = vector.broadcast %51 : f32 to vector<8x1xf32>
      %67 = arith.subf %63, %66 : vector<8x1xf32>
      %cst_37 = arith.constant 2.000000e+00 : f32
      %68 = vector.broadcast %cst_37 : f32 to vector<8x1xf32>
      %69 = arith.mulf %68, %65 : vector<8x1xf32>
      %70 = arith.mulf %69, %54 : vector<8x1xf32>
      %71 = arith.subf %56, %70 : vector<8x1xf32>
      %72 = arith.mulf %65, %65 : vector<8x1xf32>
      %73 = arith.mulf %72, %53 : vector<8x1xf32>
      %74 = arith.addf %71, %73 : vector<8x1xf32>
      %cst_38 = arith.constant 2.000000e+00 : f32
      %75 = vector.broadcast %cst_38 : f32 to vector<8x1xf32>
      %76 = arith.mulf %75, %67 : vector<8x1xf32>
      %77 = arith.mulf %76, %55 : vector<8x1xf32>
      %78 = arith.subf %57, %77 : vector<8x1xf32>
      %79 = arith.mulf %67, %67 : vector<8x1xf32>
      %80 = arith.mulf %79, %53 : vector<8x1xf32>
      %81 = arith.addf %78, %80 : vector<8x1xf32>
      %c0_39 = arith.constant 0 : index
      %c0_40 = arith.constant 0 : index
      %82 = vector.load %arg9[%c0_39, %c0_40] : memref<8x1xf32, #tpu.memory_space<vmem>>, vector<8x1xf32>
      %c0_41 = arith.constant 0 : index
      %c0_42 = arith.constant 0 : index
      %83 = vector.load %arg10[%c0_41, %c0_42] : memref<8x1xf32, #tpu.memory_space<vmem>>, vector<8x1xf32>
      %84 = arith.subf %60, %82 : vector<8x1xf32>
      %85 = arith.mulf %84, %84 : vector<8x1xf32>
      %86 = arith.subf %63, %83 : vector<8x1xf32>
      %87 = arith.mulf %86, %86 : vector<8x1xf32>
      %88 = arith.addf %85, %87 : vector<8x1xf32>
      %cst_43 = arith.constant 5.000000e+00 : f32
      %89 = vector.broadcast %cst_43 : f32 to vector<8x1xf32>
      %90 = arith.mulf %88, %89 : vector<8x1xf32>
      %91 = arith.addf %74, %81 : vector<8x1xf32>
      %cst_44 = arith.constant 5.000000e-01 : f32
      %92 = vector.broadcast %cst_44 : f32 to vector<8x1xf32>
      %93 = arith.mulf %92, %91 : vector<8x1xf32>
      %94 = arith.addf %90, %93 : vector<8x1xf32>
      %95 = vector.shape_cast %94 : vector<8x1xf32> to vector<8x1xf32>
      %96 = vector.broadcast %95 : vector<8x1xf32> to vector<8x128xf32>
      %c0_45 = arith.constant 0 : index
      %c0_46 = arith.constant 0 : index
      %97 = vector.load %arg6[%c0_45, %c0_46] : memref<8x128xf32, #tpu.memory_space<vmem>>, vector<8x128xf32>
      tpu.vector_store %arg6[%c0_45, %c0_46], %96 {strides = array<i32>} : memref<8x128xf32, #tpu.memory_space<vmem>>, vector<8x128xf32>,
    } else {
    }
    return
  }
  func.func @transform_0(%arg0: i32, %arg1: i32) -> i32 {
    %c0_i32 = arith.constant 0 : i32
    %c0_i32_0 = arith.constant 0 : i32
    return %c0_i32 : i32
  }
  func.func @transform_1(%arg0: i32, %arg1: i32) -> (i32, i32) {
    %c0_i32 = arith.constant 0 : i32
    %c0_i32_0 = arith.constant 0 : i32
    return %arg1, %c0_i32 : i32, i32
  }
  func.func @transform_2(%arg0: i32, %arg1: i32) -> (i32, i32) {
    %c0_i32 = arith.constant 0 : i32
    %c0_i32_0 = arith.constant 0 : i32
    return %c0_i32, %arg1 : i32, i32
  }
  func.func @transform_3(%arg0: i32, %arg1: i32) -> (i32, i32) {
    %c0_i32 = arith.constant 0 : i32
    return %arg0, %arg1 : i32, i32
  }
  func.func @transform_4(%arg0: i32, %arg1: i32) -> (i32, i32) {
    %c0_i32 = arith.constant 0 : i32
    %c0_i32_0 = arith.constant 0 : i32
    return %arg0, %c0_i32 : i32, i32
  }
}

</mosaic_0001>

<llo_original>
// kernel: tpu_custom_call.1
$region0: #{tpu_custom_call.1}
  #allocation0 [shape = 'u32[]', space=smem, size = 0x4, offset = 0x4, fixed_abs, tag = 'smem constant byte address 0x4 - core index']
  #allocation1 [shape = 'u32[144,128]{1,0:T(1,128)}', space=vmem, size = 0x12000, scoped, tag = 'internal scratch']
  #allocation2 [shape = 'f32[8,8]{1,0:T(8,128)}', space=vmem, size = 0x1000, scoped, tag = 'scratch operand']
  #allocation3 [shape = 'f32[8,1]{1,0:T(8,128)}', space=vmem, size = 0x1000, scoped, tag = 'scratch operand']
  #allocation4 [shape = 'f32[8,1]{1,0:T(8,128)}', space=vmem, size = 0x1000, scoped, tag = 'scratch operand']
  #allocation5 [shape = 'f32[8,1]{1,0:T(8,128)}', space=vmem, size = 0x1000, scoped, tag = 'scratch operand']
  %s0 = inlined_call_operand.vmem [shape: f32[2], index: 0, kind: input, shape index: {}]
  %s1 = inlined_call_operand.vmem [shape: f32[640,8], index: 1, kind: input, shape index: {}]
  %s2 = inlined_call_operand.vmem [shape: f32[8,640], index: 2, kind: input, shape index: {}]
  %s3 = inlined_call_operand.vmem [shape: f32[21,600], index: 3, kind: input, shape index: {}]
  %s4 = inlined_call_operand.hbm [shape: f32[24,128], index: 4, kind: output, shape index: {}]
  %s5 = sld [smem:[#allocation0]]
  $region61: #{tpu_custom_call.1} parent=0
    _
  %s7 = ssub.s32 1, %s5
  %s8 = scalar_select 0, %s7, %s5
  $region1: #{tpu_custom_call.1} parent=0
    #allocation6 [shape = 'u8[512]{0}', space=smem, size = 0x200, scoped, tag = 'input window, operand 0, single buffered']
    #allocation7 [shape = 's32[2]{0}', space=sflag, size = 0x8, scoped, tag = 'scoped memory for tpu_custom_call.1']
    #allocation8 [shape = 's32[2]{0}', space=sflag, size = 0x8, scoped, tag = 'scoped memory for tpu_custom_call.1']
    #allocation9 [shape = 'u8[8192]{0}', space=vmem, size = 0x2000, scoped, tag = 'output window, operand 0']
    %9 = vsyncpa [#allocation8], 0
    %10 = vsyncpa [#allocation7], 0
    %s11 = scalar_lea.sflag [#allocation7], 1
    %12 = vsyncpa %s11, 0
    loop: start=0, step=1, limit=17
    $region2: #{tpu_custom_call.1} parent=1 // loop_pre_header
      _
    $region3: #{tpu_custom_call.1} parent=1 // loop_header
      %s14 = sphi 0, %s18
      %p15 = scmp.ge.s32.totalorder %s14, 17
      %s21 = sphi 0, %s33
      %s22 = sphi 0, %s29
      %s23 = sphi 0, %s21
      %s24 = sphi 0, %s22
      %s25 = sphi 0, %s23
      %s26 = sphi 0, %s24
      %s34 = sphi 0, %s34
      %s36 = sphi 0, %s34
      %s37 = sphi 0, %s36
      %s51 = sphi 0, %s37
      %s57 = sphi 0, %s59
      %s60 = sphi 0, %s57
      %s61 = sphi 0, %s60
      %s77 = sphi 0, %s61
      %s83 = sphi 0, %s85
      %s86 = sphi 0, %s83
      %s87 = sphi 0, %s86
      %s103 = sphi 0, %s87
      %s111 = sphi 0, %s113
      %s114 = sphi 0, %s111
      %s115 = sphi 0, %s114
      %s131 = sphi 0, %s115
      %s137 = sphi 0, %s139
      %s140 = sphi 0, %s137
      %s141 = sphi 0, %s140
      %s157 = sphi 0, %s141
    $region4: #{tpu_custom_call.1} parent=1 // loop_header_branch
      %17 = sbr.rel (%p15) target = $region8
    $region5: #{tpu_custom_call.1} parent=1 // loop_body
      %s19 = ssub.s32 %s14, 1
      %s20 = ssub.s32 %s14, 2
      %s27 = sadd.s32 1, %s22
      %p28 = scmp.ge.s32.totalorder %s27, 5
      %s29 = scalar_select %p28, 0, %s27
      %s30 = sadd.s32 1, %s21
      %s31 = scalar_select %p28, %s30, %s21
      %p32 = scmp.ge.s32.totalorder %s31, 3
      %s33 = scalar_select %p32, 0, %s31
      %s35 = sadd.s32 %s34, 1
      %p38 = scmp.eq.s32.totalorder %s14, 14
      %p39 = scmp.ne.s32.totalorder %s34, %s36
      %p40 = scmp.eq.s32.totalorder %s14, 0
      %p41 = por %p39, %p40
      %p42 = scmp.ne.s32.totalorder %s34, %s36
      %p43 = scmp.eq.s32.totalorder %s19, 14
      %p44 = por %p42, %p43
      %p45 = scmp.ne.s32.totalorder %s36, %s37
      %p46 = scmp.eq.s32.totalorder %s19, 0
      %p47 = por %p45, %p46
      %p48 = scmp.ne.s32.totalorder %s36, %s37
      %p49 = scmp.eq.s32.totalorder %s20, 14
      %p50 = por %p48, %p49
      %p52 = scmp.ne.s32.totalorder %s37, %s51
      %p53 = scmp.eq.s32.totalorder %s20, 0
      %p54 = por %p52, %p53
      %s55 = ssub.s32 %s22, %s29
      %p56 = scmp.eq.s32.totalorder %s55, 0
      %s58 = sadd.s32 %s57, 1
      %s59 = scalar_select %p56, %s57, %s58
      %p62 = pneg %p56
      %p63 = scmp.eq.s32.totalorder %s14, 14
      %p64 = por %p62, %p63
      %p65 = scmp.ne.s32.totalorder %s57, %s60
      %p66 = scmp.eq.s32.totalorder %s14, 0
      %p67 = por %p65, %p66
      %p68 = scmp.ne.s32.totalorder %s57, %s60
      %p69 = scmp.eq.s32.totalorder %s19, 14
      %p70 = por %p68, %p69
      %p71 = scmp.ne.s32.totalorder %s60, %s61
      %p72 = scmp.eq.s32.totalorder %s19, 0
      %p73 = por %p71, %p72
      %p74 = scmp.ne.s32.totalorder %s60, %s61
      %p75 = scmp.eq.s32.totalorder %s20, 14
      %p76 = por %p74, %p75
      %p78 = scmp.ne.s32.totalorder %s61, %s77
      %p79 = scmp.eq.s32.totalorder %s20, 0
      %p80 = por %p78, %p79
      %s81 = ssub.s32 %s22, %s29
      %p82 = scmp.eq.s32.totalorder %s81, 0
      %s84 = sadd.s32 %s83, 1
      %s85 = scalar_select %p82, %s83, %s84
      %p88 = pneg %p82
      %p89 = scmp.eq.s32.totalorder %s14, 14
      %p90 = por %p88, %p89
      %p91 = scmp.ne.s32.totalorder %s83, %s86
      %p92 = scmp.eq.s32.totalorder %s14, 0
      %p93 = por %p91, %p92
      %p94 = scmp.ne.s32.totalorder %s83, %s86
      %p95 = scmp.eq.s32.totalorder %s19, 14
      %p96 = por %p94, %p95
      %p97 = scmp.ne.s32.totalorder %s86, %s87
      %p98 = scmp.eq.s32.totalorder %s19, 0
      %p99 = por %p97, %p98
      %p100 = scmp.ne.s32.totalorder %s86, %s87
      %p101 = scmp.eq.s32.totalorder %s20, 14
      %p102 = por %p100, %p101
      %p104 = scmp.ne.s32.totalorder %s87, %s103
      %p105 = scmp.eq.s32.totalorder %s20, 0
      %p106 = por %p104, %p105
      %s107 = ssub.s32 %s21, %s33
      %s108 = ssub.s32 %s22, %s29
      %s109 = sor.u32 %s107, %s108
      %p110 = scmp.eq.s32.totalorder %s109, 0
      %s112 = sadd.s32 %s111, 1
      %s113 = scalar_select %p110, %s111, %s112
      %p116 = pneg %p110
      %p117 = scmp.eq.s32.totalorder %s14, 14
      %p118 = por %p116, %p117
      %p119 = scmp.ne.s32.totalorder %s111, %s114
      %p120 = scmp.eq.s32.totalorder %s14, 0
      %p121 = por %p119, %p120
      %p122 = scmp.ne.s32.totalorder %s111, %s114
      %p123 = scmp.eq.s32.totalorder %s19, 14
      %p124 = por %p122, %p123
      %p125 = scmp.ne.s32.totalorder %s114, %s115
      %p126 = scmp.eq.s32.totalorder %s19, 0
      %p127 = por %p125, %p126
      %p128 = scmp.ne.s32.totalorder %s114, %s115
      %p129 = scmp.eq.s32.totalorder %s20, 14
      %p130 = por %p128, %p129
      %p132 = scmp.ne.s32.totalorder %s115, %s131
      %p133 = scmp.eq.s32.totalorder %s20, 0
      %p134 = por %p132, %p133
      %s135 = ssub.s32 %s21, %s33
      %p136 = scmp.eq.s32.totalorder %s135, 0
      %s138 = sadd.s32 %s137, 1
      %s139 = scalar_select %p136, %s137, %s138
      %p142 = pneg %p136
      %p143 = scmp.eq.s32.totalorder %s14, 14
      %p144 = por %p142, %p143
      %p145 = scmp.ne.s32.totalorder %s137, %s140
      %p146 = scmp.eq.s32.totalorder %s14, 0
      %p147 = por %p145, %p146
      %p148 = scmp.ne.s32.totalorder %s137, %s140
      %p149 = scmp.eq.s32.totalorder %s19, 14
      %p150 = por %p148, %p149
      %p151 = scmp.ne.s32.totalorder %s140, %s141
      %p152 = scmp.eq.s32.totalorder %s19, 0
      %p153 = por %p151, %p152
      %p154 = scmp.ne.s32.totalorder %s140, %s141
      %p155 = scmp.eq.s32.totalorder %s20, 14
      %p156 = por %p154, %p155
      %p158 = scmp.ne.s32.totalorder %s141, %s157
      %p159 = scmp.eq.s32.totalorder %s20, 0
      %p160 = por %p158, %p159
      %p161 = scmp.le.s32.totalorder 1, %s14
      %p162 = scmp.lt.s32.totalorder %s14, 16
      %p163 = pnand %p161, %p162
      %p164 = pneg %p163
      // Predicated region
      $region9: #{tpu_custom_call.1} parent=5 // pred_check
        _
      $region10: #{tpu_custom_call.1} parent=5 // pred_check_branch
        %166 = sbr.rel (%p163) target = $region12
      $region11: #{tpu_custom_call.1} parent=5 // pred_region
        %s167 = ssub.s32 %s14, 1
        // Predicated region
        $region13: #{tpu_custom_call.1} parent=11 // pred_check
          %p168 = pneg %p47
        $region14: #{tpu_custom_call.1} parent=11 // pred_check_branch
          %170 = sbr.rel (%p168) target = $region16
        $region15: #{tpu_custom_call.1} parent=11 // pred_region
          %s172 = ssub.s32 16, 16
          %173 = vsyncadd [#allocation8], %s172
          %s175 = sshll.u32 %s0, 4
          %s176 = int_to_ptr.vmem [resolvable:$true] %s175
          %178 = dma.vmem_to_smem %s176, 16, [#allocation6], [#allocation8]
        $region16: #{tpu_custom_call.1} parent=11 // pred_fallthru
          _
      $region12: #{tpu_custom_call.1} parent=5 // pred_fallthru
        _
      %p179 = scmp.lt.s32.totalorder %s14, 15
      // Predicated region
      $region17: #{tpu_custom_call.1} parent=5 // pred_check
        %p180 = pneg %p179
      $region18: #{tpu_custom_call.1} parent=5 // pred_check_branch
        %182 = sbr.rel (%p180) target = $region20
      $region19: #{tpu_custom_call.1} parent=5 // pred_region
        // Predicated region
        $region21: #{tpu_custom_call.1} parent=19 // pred_check
          %p183 = pneg %p67
        $region22: #{tpu_custom_call.1} parent=19 // pred_check_branch
          %185 = sbr.rel (%p183) target = $region24
        $region23: #{tpu_custom_call.1} parent=19 // pred_region
          %s186 = smul.u32 16, %s22
          %p187 = scmp.lt.s32.totalorder %s186, 79
          %s188 = scalar_select %p187, %s186, 79
          %s189 = smul.addr %s188, 8
          %s190 = scalar_lea.vmem %s1, %s189
          %s191 = smul.u32 16, %s22
        $region24: #{tpu_custom_call.1} parent=19 // pred_fallthru
          _
        // Predicated region
        $region25: #{tpu_custom_call.1} parent=19 // pred_check
          %p192 = pneg %p93
        $region26: #{tpu_custom_call.1} parent=19 // pred_check_branch
          %194 = sbr.rel (%p192) target = $region28
        $region27: #{tpu_custom_call.1} parent=19 // pred_region
          %p195 = scmp.lt.s32.totalorder %s22, 4
          %s196 = scalar_select %p195, %s22, 4
          %s197 = smul.addr %s196, 8
          %s198 = scalar_lea.vmem %s2, %s197
        $region28: #{tpu_custom_call.1} parent=19 // pred_fallthru
          _
        // Predicated region
        $region29: #{tpu_custom_call.1} parent=19 // pred_check
          %p199 = pneg %p121
        $region30: #{tpu_custom_call.1} parent=19 // pred_check_branch
          %201 = sbr.rel (%p199) target = $region32
        $region31: #{tpu_custom_call.1} parent=19 // pred_region
          %p202 = scmp.lt.s32.totalorder %s21, 2
          %s203 = scalar_select %p202, %s21, 2
          %p204 = scmp.lt.s32.totalorder %s22, 4
          %s205 = scalar_select %p204, %s22, 4
          %s206 = smul.addr %s203, 5
          %s207 = sadd.s32 %s205, %s206
          %s208 = smul.addr %s207, 8
          %s209 = scalar_lea.vmem %s3, %s208
        $region32: #{tpu_custom_call.1} parent=19 // pred_fallthru
          _
      $region20: #{tpu_custom_call.1} parent=5 // pred_fallthru
        _
      %p210 = scmp.le.s32.totalorder 1, %s14
      %p211 = scmp.lt.s32.totalorder %s14, 16
      %p212 = pnand %p210, %p211
      %p213 = pneg %p212
      // Predicated region
      $region33: #{tpu_custom_call.1} parent=5 // pred_check
        _
      $region34: #{tpu_custom_call.1} parent=5 // pred_check_branch
        %215 = sbr.rel (%p212) target = $region36
      $region35: #{tpu_custom_call.1} parent=5 // pred_region
        %s216 = ssub.s32 %s14, 1
        // Predicated region
        $region37: #{tpu_custom_call.1} parent=35 // pred_check
          %p217 = pneg %p47
        $region38: #{tpu_custom_call.1} parent=35 // pred_check_branch
          %219 = sbr.rel (%p217) target = $region40
        $region39: #{tpu_custom_call.1} parent=35 // pred_region
          %220 = dma.done [#allocation8], 16
        $region40: #{tpu_custom_call.1} parent=35 // pred_fallthru
          _
        %221 = sfence
        %p222 = pneg %p47
        %p223 = pneg %p44
        %s224 = smul.u32 16, %s24
        %p225 = scmp.lt.s32.totalorder %s224, 79
        %s226 = scalar_select %p225, %s224, 79
        %s227 = smul.addr %s226, 8
        %s228 = scalar_lea.vmem %s1, %s227
        %p229 = pneg %p73
        %p230 = pneg %p70
        %p231 = scmp.lt.s32.totalorder %s24, 4
        %s232 = scalar_select %p231, %s24, 4
        %s233 = smul.addr %s232, 8
        %s234 = scalar_lea.vmem %s2, %s233
        %p235 = pneg %p99
        %p236 = pneg %p96
        %p237 = scmp.lt.s32.totalorder %s23, 2
        %s238 = scalar_select %p237, %s23, 2
        %p239 = scmp.lt.s32.totalorder %s24, 4
        %s240 = scalar_select %p239, %s24, 4
        %s241 = smul.addr %s238, 5
        %s242 = sadd.s32 %s240, %s241
        %s243 = smul.addr %s242, 8
        %s244 = scalar_lea.vmem %s3, %s243
        %p245 = pneg %p127
        %p246 = pneg %p124
        %p247 = pneg %p153
        %p248 = pneg %p150
        %s249 = sand.u32 %s140, 1
        %s250 = scalar_lea.sflag [#allocation7], %s249
        %s251 = sand.u32 %s140, 1
        %s252 = smul.addr %s251, 8
        %s253 = scalar_lea.vmem [#allocation9], %s252
        %s254 = smul.u32 16, %s24
        %p255 = scmp.lt.s32.totalorder %s254, 79
        %s256 = scalar_select %p255, %s254, 79
        %s257 = smul.addr %s256, 8
        %s258 = scalar_lea.vmem %s1, %s257
        %s259 = smul.u32 16, %s24
        %p260 = scmp.lt.s32.totalorder %s24, 4
        %s261 = scalar_select %p260, %s24, 4
        %s262 = smul.addr %s261, 8
        %s263 = scalar_lea.vmem %s2, %s262
        %p264 = scmp.lt.s32.totalorder %s23, 2
        %s265 = scalar_select %p264, %s23, 2
        %p266 = scmp.lt.s32.totalorder %s24, 4
        %s267 = scalar_select %p266, %s24, 4
        %s268 = smul.addr %s265, 5
        %s269 = sadd.s32 %s267, %s268
        %s270 = smul.addr %s269, 8
        %s271 = scalar_lea.vmem %s3, %s270
        %p272 = scmp.eq.s32.totalorder %s24, 0
        // Predicated region
        $region41: #{tpu_custom_call.1} parent=35 // pred_check
          %p273 = pneg %p272
        $region42: #{tpu_custom_call.1} parent=35 // pred_check_branch
          %275 = sbr.rel (%p273) target = $region44
        $region43: #{tpu_custom_call.1} parent=35 // pred_region
          %vm276 = vcmask 64512
          %277 = vst.msk [vmem:[#allocation2] sm:$0xff] %vm276, 0.0
          %vm278 = vcmask 7168
          %279 = vst.msk [vmem:[#allocation3] sm:$0xff] %vm278, -inf
          %280 = vst.msk [vmem:[#allocation4] sm:$0xff] %vm278, 0.0
          %281 = vst.msk [vmem:[#allocation5] sm:$0xff] %vm278, 0.0
        $region44: #{tpu_custom_call.1} parent=35 // pred_fallthru
          _
        %v282 = vld [vmem:[%s271] sm:$0xff]
        %v283 = vlaneseq
        %v284 = vand.u32 %v283, 127
        %p285 = scmp.eq.s32.totalorder %s24, 4
        %s286 = scalar_select %p285, 88, 128
        %v287 = vstv %s286
        %vm288 = vcmp.lt.s32.totalorder %v284, %v287
        %v289 = vsel %vm288, 1, 0
        %vm290 = vcmp.eq.s32.totalorder %v289, 1
        %v291 = vsel %vm290, %v282, 0.0
        %v292 = vld [vmem:[#allocation2] sm:$0xff]
        %v293 = vld [vmem:[%s258] sm:$0xff]
        %v294 = vld [vmem:[%s258 + $0x8] sm:$0xff]
        %v295 = vld [vmem:[%s258 + $0x10] sm:$0xff]
        %v296 = vld [vmem:[%s258 + $0x18] sm:$0xff]
        %v297 = vld [vmem:[%s258 + $0x20] sm:$0xff]
        %v298 = vld [vmem:[%s258 + $0x28] sm:$0xff]
        %v299 = vld [vmem:[%s258 + $0x30] sm:$0xff]
        %v300 = vld [vmem:[%s258 + $0x38] sm:$0xff]
        %v301 = vld [vmem:[%s258 + $0x40] sm:$0xff]
        %v302 = vld [vmem:[%s258 + $0x48] sm:$0xff]
        %v303 = vld [vmem:[%s258 + $0x50] sm:$0xff]
        %v304 = vld [vmem:[%s258 + $0x58] sm:$0xff]
        %v305 = vld [vmem:[%s258 + $0x60] sm:$0xff]
        %v306 = vld [vmem:[%s258 + $0x68] sm:$0xff]
        %v307 = vld [vmem:[%s258 + $0x70] sm:$0xff]
        %v308 = vld [vmem:[%s258 + $0x78] sm:$0xff]
        %309 = vmatprep.subr.mxu0 0.0
        %310 = vmatpush1.msra.mxu0 %v308
        %311 = vmatprep.subr.mxu0 0.0
        %312 = vmatpush1.msra.mxu0 %v307
        %313 = vmatprep.subr.mxu0 0.0
        %314 = vmatpush1.msra.mxu0 %v306
        %315 = vmatprep.subr.mxu0 0.0
        %316 = vmatpush1.msra.mxu0 %v305
        %317 = vmatprep.subr.mxu0 0.0
        %318 = vmatpush1.msra.mxu0 %v304
        %319 = vmatprep.subr.mxu0 0.0
        %320 = vmatpush1.msra.mxu0 %v303
        %321 = vmatprep.subr.mxu0 0.0
        %322 = vmatpush1.msra.mxu0 %v302
        %323 = vmatprep.subr.mxu0 0.0
        %324 = vmatpush1.msra.mxu0 %v301
        %325 = vmatprep.subr.mxu0 0.0
        %326 = vmatpush1.msra.mxu0 %v300
        %327 = vmatprep.subr.mxu0 0.0
        %328 = vmatpush1.msra.mxu0 %v299
        %329 = vmatprep.subr.mxu0 0.0
        %330 = vmatpush1.msra.mxu0 %v298
        %331 = vmatprep.subr.mxu0 0.0
        %332 = vmatpush1.msra.mxu0 %v297
        %333 = vmatprep.subr.mxu0 0.0
        %334 = vmatpush1.msra.mxu0 %v296
        %335 = vmatprep.subr.mxu0 0.0
        %336 = vmatpush1.msra.mxu0 %v295
        %337 = vmatprep.subr.mxu0 0.0
        %338 = vmatpush1.msra.mxu0 %v294
        %339 = vmatprep.subr.mxu0 0.0
        %340 = vmatpush1.msra.mxu0 %v293
        %341 = vmatprep.subr.mxu0 0.0
        %342 = vmatpush2.msra.mxu0 0.0
        %343 = vmatprep.subr.mxu0 0.0
        %344 = vmatpush2.msra.mxu0 0.0
        %345 = vmatprep.subr.mxu0 0.0
        %346 = vmatpush2.msra.mxu0 0.0
        %347 = vmatprep.subr.mxu0 0.0
        %348 = vmatpush2.msra.mxu0 0.0
        %349 = vmatprep.subr.mxu0 0.0
        %350 = vmatpush2.msra.mxu0 0.0
        %351 = vmatprep.subr.mxu0 0.0
        %352 = vmatpush2.msra.mxu0 0.0
        %353 = vmatprep.subr.mxu0 0.0
        %354 = vmatpush2.msra.mxu0 0.0
        %355 = vmatprep.subr.mxu0 0.0
        %356 = vmatpush2.msra.mxu0 0.0
        %357 = vmatprep.subr.mxu0 0.0
        %358 = vmatpush2.msra.mxu0 0.0
        %359 = vmatprep.subr.mxu0 0.0
        %360 = vmatpush2.msra.mxu0 0.0
        %361 = vmatprep.subr.mxu0 0.0
        %362 = vmatpush2.msra.mxu0 0.0
        %363 = vmatprep.subr.mxu0 0.0
        %364 = vmatpush2.msra.mxu0 0.0
        %365 = vmatprep.subr.mxu0 0.0
        %366 = vmatpush2.msra.mxu0 0.0
        %367 = vmatprep.subr.mxu0 0.0
        %368 = vmatpush2.msra.mxu0 0.0
        %369 = vmatprep.subr.mxu0 0.0
        %370 = vmatpush2.msra.mxu0 0.0
        %371 = vmatprep.subr.mxu0 0.0
        %372 = vmatpush2.msra.mxu0 0.0
        %373 = vmatprep.mubr.f32.mxu0 0.0
        %374 = vmatmul.mubr.f32.gmra.mxu0 %v291
        %v375 = vpop.f32.mrf.mxu0
        %v376 = vadd.f32 0.0, %v375
        %v377 = vpop.f32.mrf.mxu0
        %378 = vdwg.mxu0
        %v379 = vadd.f32 %v292, %v376
        %vm380 = vcmask 64512
        %381 = vst.msk [vmem:[#allocation2] sm:$0xff] %vm380, %v379
        %382 = vmax.xlane.f32.xlu0 %v291
        %v383 = vpop.xlane.xlu0 %382
        %vm384 = vcmp.eq.f32.partialorder %v291, %v383
        %v385 = vld [vmem:[%s263] sm:$0x1]
        %v386 = vld [vmem:[%s263 + $0x1] sm:$0x1]
        %v387 = vlaneseq
        %v388 = vshrl.u32 %v387, 7
        %v389 = vsub.s32 0, %v388
        %v390 = vrot.slane %v385, %v389
        %v391 = vsel %vm384, %v390, -inf
        %392 = vmax.xlane.f32.xlu0 %v391
        %v393 = vpop.xlane.xlu0 %392
        %v394 = vlaneseq
        %v395 = vshrl.u32 %v394, 7
        %v396 = vsub.s32 0, %v395
        %v397 = vrot.slane %v386, %v396
        %v398 = vsel %vm384, %v397, -inf
        %399 = vmax.xlane.f32.xlu0 %v398
        %v400 = vpop.xlane.xlu0 %399
        %v401 = vld [vmem:[#allocation3] sm:$0xff]
        %vm402 = vcmp.gt.f32.partialorder %v383, %v401
        %v403 = vsel %vm402, %v383, %v401
        %vm404 = vcmask 7168
        %405 = vst.msk [vmem:[#allocation3] sm:$0xff] %vm404, %v403
        %v406 = vld [vmem:[#allocation4] sm:$0xff]
        %v407 = vsel %vm402, %v393, %v406
        %408 = vst.msk [vmem:[#allocation4] sm:$0xff] %vm404, %v407
        %v409 = vld [vmem:[#allocation5] sm:$0xff]
        %v410 = vsel %vm402, %v400, %v409
        %411 = vst.msk [vmem:[#allocation5] sm:$0xff] %vm404, %v410
        // Predicated region
        $region45: #{tpu_custom_call.1} parent=35 // pred_check
          %p412 = pneg %p285
        $region46: #{tpu_custom_call.1} parent=35 // pred_check_branch
          %414 = sbr.rel (%p412) target = $region48
        $region47: #{tpu_custom_call.1} parent=35 // pred_region
          %s415 = sld [smem:[#allocation6]]
          %s416 = sld [smem:[#allocation6 + $0x1]]
          %v417 = vld [vmem:[#allocation2] sm:$0xff]
          %v418 = vstv %s415
          %v419 = vmul.f32 %v418, %v417
          %421 = vrot.lane.b32.xlu0 %v419, 1
          %v422 = vpop.permute.xlu0 %421
          %v424 = vadd.f32 %v417, %v422
          %v425 = vstv %s416
          %v426 = vmul.f32 %v425, %v417
          %428 = vrot.lane.b32.xlu0 %v426, 2
          %v429 = vpop.permute.xlu0 %428
          %v431 = vadd.f32 %v417, %v429
          %v432 = vsub.f32 %v424, %v418
          %v433 = vsub.f32 %v431, %v425
          %v434 = vmul.f32 %v432, 2.0
          %v435 = vmul.f32 %v434, %v417
          %437 = vrot.lane.b32.xlu0 %v435, 2
          %v438 = vpop.permute.xlu0 %437
          %v440 = vsub.f32 %v417, %v438
          %v441 = vmul.f32 %v432, %v432
          %443 = vrot.lane.b32.xlu0 %v417, 1
          %v444 = vpop.permute.xlu0 %443
          %v446 = vmul.f32 %v441, %v444
          %448 = vrot.lane.b32.xlu0 %v446, 2
          %v449 = vpop.permute.xlu0 %448
          %v451 = vadd.f32 %v440, %v449
          %v452 = vmul.f32 %v433, 2.0
          %v453 = vmul.f32 %v452, %v417
          %455 = vrot.lane.b32.xlu0 %v453, 2
          %v456 = vpop.permute.xlu0 %455
          %v458 = vsub.f32 %v417, %v456
          %v459 = vmul.f32 %v433, %v433
          %460 = vrot.lane.b32.xlu0 %v417, 2
          %v461 = vpop.permute.xlu0 %460
          %v463 = vmul.f32 %v459, %v461
          %465 = vrot.lane.b32.xlu0 %v463, 2
          %v466 = vpop.permute.xlu0 %465
          %v468 = vadd.f32 %v458, %v466
          %v469 = vld [vmem:[#allocation4] sm:$0xff]
          %v470 = vld [vmem:[#allocation5] sm:$0xff]
          %472 = vrot.lane.b32.xlu0 %v469, 1
          %v473 = vpop.permute.xlu0 %472
          %v475 = vsub.f32 %v424, %v473
          %v476 = vmul.f32 %v475, %v475
          %478 = vrot.lane.b32.xlu0 %v470, 2
          %v479 = vpop.permute.xlu0 %478
          %v481 = vsub.f32 %v431, %v479
          %v482 = vmul.f32 %v481, %v481
          %484 = vrot.lane.b32.xlu0 %v482, 127
          %v485 = vpop.permute.xlu0 %484
          %v487 = vadd.f32 %v476, %v485
          %v488 = vmul.f32 %v487, 5.0
          %490 = vrot.lane.b32.xlu0 %v468, 127
          %v491 = vpop.permute.xlu0 %490
          %v493 = vadd.f32 %v451, %v491
          %v494 = vmul.f32 %v493, 0.5
          %496 = vrot.lane.b32.xlu0 %v494, 126
          %v497 = vpop.permute.xlu0 %496
          %v499 = vadd.f32 %v488, %v497
          %501 = vset.pattern.permute.xlu0 1
          %502 = vperm.xlu0 %501, %v499
          %v503 = vpop.permute.xlu0 %502
          %505 = vst [vmem:[%s253] sm:$0xff] %v503
        $region48: #{tpu_custom_call.1} parent=35 // pred_fallthru
          _
        %s506 = sand.u32 %s140, 1
        %s507 = scalar_lea.sflag [#allocation7], %s506
        %s508 = sand.u32 %s140, 1
        %s509 = smul.addr %s508, 8
        %s510 = scalar_lea.vmem [#allocation9], %s509
        // Predicated region
        $region49: #{tpu_custom_call.1} parent=35 // pred_check
          %p511 = pneg %p150
        $region50: #{tpu_custom_call.1} parent=35 // pred_check_branch
          %513 = sbr.rel (%p511) target = $region52
        $region51: #{tpu_custom_call.1} parent=35 // pred_region
          %s515 = ssub.s32 128, 128
          %516 = vsyncadd %s507, %s515
          %s517 = smul.addr %s23, 128
          %s518 = scalar_lea.hbm %s4, %s517
          %s520 = sshll.u32 %s510, 4
          %s521 = int_to_ptr.vmem [resolvable:$true] %s520
          %523 = dma.vmem_to_hbm [thread:$0]  %s521, 128, %s518, %s507
        $region52: #{tpu_custom_call.1} parent=35 // pred_fallthru
          _
      $region36: #{tpu_custom_call.1} parent=5 // pred_fallthru
        _
      %p524 = scmp.le.s32.totalorder 2, %s14
      // Predicated region
      $region53: #{tpu_custom_call.1} parent=5 // pred_check
        %p525 = pneg %p524
      $region54: #{tpu_custom_call.1} parent=5 // pred_check_branch
        %527 = sbr.rel (%p525) target = $region56
      $region55: #{tpu_custom_call.1} parent=5 // pred_region
        %s528 = ssub.s32 %s14, 2
        // Predicated region
        $region57: #{tpu_custom_call.1} parent=55 // pred_check
          %p529 = pneg %p156
        $region58: #{tpu_custom_call.1} parent=55 // pred_check_branch
          %531 = sbr.rel (%p529) target = $region60
        $region59: #{tpu_custom_call.1} parent=55 // pred_region
          %s532 = sand.u32 %s141, 1
          %s533 = scalar_lea.sflag [#allocation7], %s532
          %s534 = sand.u32 %s141, 1
          %s535 = smul.addr %s534, 8
          %s536 = scalar_lea.vmem [#allocation9], %s535
          %537 = dma.done %s533, 128
        $region60: #{tpu_custom_call.1} parent=55 // pred_fallthru
          _
      $region56: #{tpu_custom_call.1} parent=5 // pred_fallthru
        _
    $region6: #{tpu_custom_call.1} parent=1 // loop_footer
      %s18 = sadd.s32 1, %s14
    $region7: #{tpu_custom_call.1} parent=1 // loop_footer_branch
      %13 = sbr.rel target = $region3
    $region8: #{tpu_custom_call.1} parent=1 // loop_exit
      _
    %538 = vsyncpa [#allocation7], 1
    %s539 = scalar_lea.sflag [#allocation7], 1
    %540 = vsyncpa %s539, 1
    %541 = vsyncpa [#allocation8], 1
    %s542 = scalar_lea.sflag [#allocation8], 1
    %543 = vsyncpa %s542, 1

</llo_original>
